<compile_context>
chip_gen: v7x
topology: tpu7x:2x2x1
jax: 0.10.0
libtpu: 0.0.40
codegen_flags: <defaults>
</compile_context>

<pallas_src>
import functools

import numpy as np

import jax
import jax.numpy as jnp
from jax.experimental import pallas as pl
from jax.experimental.pallas import tpu as pltpu


def extract_patches(x, p):
    """(B, C, H, W) -> (B, N, K) with N=(H/p)*(W/p), K=C*p*p in (C, ph, pw) order.

    Matches the flattening of the PyTorch conv weight (E, C, p, p), so the
    strided Conv2d is exactly patches @ weight.T + bias, and the patch row
    order matches Rearrange('b e h w -> b (h w) e').
    """
    B, C, H, W = x.shape
    Hp, Wp = H // p, W // p
    x = x.reshape(B, C, Hp, p, Wp, p)
    x = x.transpose(0, 2, 4, 1, 3, 5)       # (B, Hp, Wp, C, ph, pw)
    return x.reshape(B, Hp * Wp, C * p * p)


def patch_embed_kernel(p_ref, w_ref, pb_ref, o_ref, *, collapse):
    # p_ref:  (tb, N, K)  bf16 patches for tb batch rows of this grid step
    # w_ref:  (K, E)      bf16 flattened conv weight (constant block -> 1 DMA)
    # pb_ref: (N, E)      f32 positions + conv bias (constant block -> 1 DMA)
    # o_ref:  (tb, N, E)  output
    w = w_ref[...]
    pb = pb_ref[...]
    if collapse:
        # N % 8 == 0: collapse (tb, N) -> sublane dim and run one MXU pass.
        tb, n, k = p_ref.shape
        e = w.shape[1]
        acc = jnp.dot(p_ref[...].reshape(tb * n, k), w,
                      preferred_element_type=jnp.float32)
        o_ref[...] = (acc.reshape(tb, n, e) + pb[None, :, :]).astype(o_ref.dtype)
    else:
        # tb == 1 fallback (N not a multiple of 8): plain 2D matmul + add.
        acc = jnp.dot(p_ref[0], w, preferred_element_type=jnp.float32)
        o_ref[0] = (acc + pb).astype(o_ref.dtype)


def _largest_divisor_at_most(n, cap):
    cap = max(1, min(n, cap))
    for d in range(cap, 0, -1):
        if n % d == 0:
            return d
    return 1


@functools.partial(jax.jit, static_argnames=("patch_size", "out_dtype"))
def patch_embedding(x, conv_w, conv_b, positions, patch_size, out_dtype=jnp.float32):
    """x: (B, C, H, W); conv_w: (E, C, p, p); conv_b: (E,); positions: (N, E).

    Returns (B, N, E), matching PatchEmbedding.forward:
    Rearrange(Conv2d(stride=p)(x), 'b e h w -> b (h w) e') + positions.
    """
    B, C, H, W = x.shape
    E = conv_w.shape[0]
    p = patch_size
    N = (H // p) * (W // p)
    K = C * p * p

    # Single fused XLA pass over x: f32 read -> bf16 patch write. No pads.
    patches = extract_patches(x.astype(jnp.bfloat16), p)          # (B, N, K)

    # (E, C, p, p) -> (K, E), bf16 for the MXU; stays resident in VMEM.
    w_flat = conv_w.reshape(E, K).T.astype(jnp.bfloat16)           # (K, E)

    # Fold conv bias into positions once: (N, E) f32, resident in VMEM.
    pos_bias = positions.astype(jnp.float32) + conv_b.astype(jnp.float32)[None, :]

    out_bytes = np.dtype(out_dtype).itemsize

    # Batch tile: target ~512 flattened rows per grid step, capped by a VMEM
    # budget for the double-buffered patch + output blocks.
    if N % 8 == 0:
        tb = _largest_divisor_at_most(B, max(1, 512 // max(N, 1)))
        while tb > 1 and 2 * tb * N * (K * 2 + E * out_bytes) > (12 << 20):
            tb = _largest_divisor_at_most(B, tb - 1)
    else:
        tb = 1
    collapse = tb > 1

    # Double-buffered blocks: patches + out per step, plus constant w / pos.
    needed = (2 * tb * N * K * 2
              + 2 * tb * N * E * out_bytes
              + 2 * K * E * 2
              + 2 * N * E * 4)
    vmem_limit = int(min(64 << 20, max(32 << 20, needed + (8 << 20))))

    cost = pl.CostEstimate(
        flops=2 * B * N * K * E,
        transcendentals=0,
        bytes_accessed=(B * N * K * 2        # bf16 patches
                        + K * E * 2          # bf16 weight (once)
                        + N * E * 4          # f32 positions+bias (once)
                        + B * N * E * out_bytes),
    )

    out = pl.pallas_call(
        functools.partial(patch_embed_kernel, collapse=collapse),
        out_shape=jax.ShapeDtypeStruct((B, N, E), out_dtype),
        grid_spec=pl.GridSpec(
            grid=(B // tb,),
            in_specs=[
                pl.BlockSpec((tb, N, K), lambda i: (i, 0, 0)),
                pl.BlockSpec((K, E), lambda i: (0, 0)),
                pl.BlockSpec((N, E), lambda i: (0, 0)),
            ],
            out_specs=pl.BlockSpec((tb, N, E), lambda i: (i, 0, 0)),
        ),
        compiler_params=pltpu.CompilerParams(
            dimension_semantics=("parallel",),
            vmem_limit_bytes=vmem_limit,
        ),
        cost_estimate=cost,
    )(patches, w_flat, pos_bias)

    return out


def patch_embedding_ref(x, conv_w, conv_b, positions, patch_size):
    """Pure-JAX f32 reference (same math, no Pallas, no bf16)."""
    B, C, H, W = x.shape
    E = conv_w.shape[0]
    p = patch_size
    patches = extract_patches(x.astype(jnp.float32), p)
    w_flat = conv_w.reshape(E, C * p * p).T.astype(jnp.float32)
    out = jnp.einsum("bnk,ke->bne", patches, w_flat)
    out = out + conv_b.reshape(1, 1, E).astype(jnp.float32) + positions[None].astype(jnp.float32)
    return out


# TODO(synk): the remaining CIPatchMidNet blocks (MultiHeadAttention, Linear
# projection, GroupNorm, TAUSubBlock feed-forward, 1x1 convs) are outside the
# scope of this kernel; only the PatchEmbedding hot path is translated here.

if __name__ == "__main__":
    # Small shapes consistent with the module (in_channels, patch_size, emb_size, img_size)
    B, C = 2, 4
    patch_size = 4
    E = 128
    H, W = 16, 32
    N = (H // patch_size) * (W // patch_size)  # 32 patches
    K = C * patch_size * patch_size            # 64

    key = jax.random.PRNGKey(0)
    kx, kw, kb, kp = jax.random.split(key, 4)
    x = jax.random.normal(kx, (B, C, H, W), dtype=jnp.float32)
    # Deterministic parameter init (synthetic; mirrors nn.Conv2d / nn.Parameter shapes).
    conv_w = jax.random.normal(kw, (E, C, patch_size, patch_size), dtype=jnp.float32) * 0.02
    conv_b = jax.random.normal(kb, (E,), dtype=jnp.float32) * 0.02
    positions = jax.random.normal(kp, (N, E), dtype=jnp.float32)

    out = patch_embedding(x, conv_w, conv_b, positions, patch_size=patch_size)
    out = jax.block_until_ready(out)

    ref = patch_embedding_ref(x, conv_w, conv_b, positions, patch_size)
    assert out.shape == (B, N, E), out.shape
    # bf16 MXU inputs with f32 accumulation -> loosened tolerance.
    assert jnp.allclose(out, ref, atol=2e-2, rtol=2e-2), "mismatch vs reference"

    print("KERNEL_OK")
</pallas_src>

<mosaic_0001>
module attributes {stable_mosaic.version = 11 : i64} {
  func.func @patch_embed_kernel(%arg0: i32, %arg1: memref<2x32x64xbf16, #tpu.memory_space<vmem>>, %arg2: memref<64x128xbf16, #tpu.memory_space<vmem>>, %arg3: memref<32x128xf32, #tpu.memory_space<vmem>>, %arg4: memref<2x32x128xf32, #tpu.memory_space<vmem>>) attributes {dimension_semantics = [#tpu.dimension_semantics<parallel>], iteration_bounds = array<i64: 1>, scalar_prefetch = 0 : i64, scratch_operands = 0 : i64, tpu.core_type = #tpu.core_type<tc>, window_params = [{transform_indices = @transform_0, window_bounds = array<i64: 2, 32, 64>}, {pipeline_mode = #tpu.pipeline_mode<synchronous>, transform_indices = @transform_1, window_bounds = array<i64: 64, 128>}, {pipeline_mode = #tpu.pipeline_mode<synchronous>, transform_indices = @transform_2, window_bounds = array<i64: 32, 128>}, {transform_indices = @transform_3, window_bounds = array<i64: 2, 32, 128>}]} {
    %c0 = arith.constant 0 : index
    %c0_0 = arith.constant 0 : index
    %0 = vector.load %arg2[%c0, %c0_0] : memref<64x128xbf16, #tpu.memory_space<vmem>>, vector<64x128xbf16>
    %c0_1 = arith.constant 0 : index
    %c0_2 = arith.constant 0 : index
    %1 = vector.load %arg3[%c0_1, %c0_2] : memref<32x128xf32, #tpu.memory_space<vmem>>, vector<32x128xf32>
    %c0_3 = arith.constant 0 : index
    %c0_4 = arith.constant 0 : index
    %c0_5 = arith.constant 0 : index
    %2 = vector.load %arg1[%c0_3, %c0_4, %c0_5] : memref<2x32x64xbf16, #tpu.memory_space<vmem>>, vector<2x32x64xbf16>
    %3 = vector.shape_cast %2 : vector<2x32x64xbf16> to vector<64x64xbf16>
    %cst = arith.constant dense<0.000000e+00> : vector<64x128xf32>
    %4 = tpu.matmul %3, %0, %cst {dimension_numbers = #tpu.dot_dimension_numbers<[1], [0], [0], [1], [0, 0, 1, 1], [], []>} : vector<64x64xbf16>, vector<64x128xbf16>, vector<64x128xf32> -> vector<64x128xf32>
    %5 = vector.shape_cast %4 : vector<64x128xf32> to vector<2x32x128xf32>
    %6 = vector.shape_cast %1 : vector<32x128xf32> to vector<1x32x128xf32>
    %7 = vector.broadcast %6 : vector<1x32x128xf32> to vector<2x32x128xf32>
    %8 = arith.addf %5, %7 : vector<2x32x128xf32>
    %c0_6 = arith.constant 0 : index
    %c0_7 = arith.constant 0 : index
    %c0_8 = arith.constant 0 : index
    %9 = vector.load %arg4[%c0_6, %c0_7, %c0_8] : memref<2x32x128xf32, #tpu.memory_space<vmem>>, vector<2x32x128xf32>
    tpu.vector_store %arg4[%c0_6, %c0_7, %c0_8], %8 {strides = array<i32>} : memref<2x32x128xf32, #tpu.memory_space<vmem>>, vector<2x32x128xf32>,
    return
  }
  func.func @transform_0(%arg0: i32) -> (i32, i32, i32) {
    %c0_i32 = arith.constant 0 : i32
    %c0_i32_0 = arith.constant 0 : i32
    %c0_i32_1 = arith.constant 0 : i32
    return %arg0, %c0_i32, %c0_i32_0 : i32, i32, i32
  }
  func.func @transform_1(%arg0: i32) -> (i32, i32) {
    %c0_i32 = arith.constant 0 : i32
    %c0_i32_0 = arith.constant 0 : i32
    %c0_i32_1 = arith.constant 0 : i32
    return %c0_i32, %c0_i32_0 : i32, i32
  }
  func.func @transform_2(%arg0: i32) -> (i32, i32) {
    %c0_i32 = arith.constant 0 : i32
    %c0_i32_0 = arith.constant 0 : i32
    %c0_i32_1 = arith.constant 0 : i32
    return %c0_i32, %c0_i32_0 : i32, i32
  }
  func.func @transform_3(%arg0: i32) -> (i32, i32, i32) {
    %c0_i32 = arith.constant 0 : i32
    %c0_i32_0 = arith.constant 0 : i32
    %c0_i32_1 = arith.constant 0 : i32
    return %arg0, %c0_i32, %c0_i32_0 : i32, i32, i32
  }
}

</mosaic_0001>

<llo_original>
// kernel: patch_embedding.1
$region0: #{patch_embedding.1}
  #allocation0 [shape = 'u32[]', space=smem, size = 0x4, offset = 0x4, fixed_abs, tag = 'smem constant byte address 0x4 - core index']
  #allocation1 [shape = 'u32[144,128]{1,0:T(1,128)}', space=vmem, size = 0x12000, scoped, tag = 'internal scratch']
  %s0 = inlined_call_operand.vmem [shape: bf16[2,32,64], index: 0, kind: input, shape index: {}]
  %s1 = inlined_call_operand.vmem [shape: bf16[64,128], index: 1, kind: input, shape index: {}]
  %s2 = inlined_call_operand.vmem [shape: f32[32,128], index: 2, kind: input, shape index: {}]
  %s3 = inlined_call_operand.hbm [shape: f32[2,32,128], index: 3, kind: output, shape index: {}]
  %s4 = sld [smem:[#allocation0]]
  $region22: #{patch_embedding.1} parent=0
    _
  %s6 = ssub.s32 1, %s4
  %s7 = scalar_select 0, %s6, %s4
  $region1: #{patch_embedding.1} parent=0
    #allocation2 [shape = 'u8[32768]{0}', space=vmem, size = 0x8000, scoped, tag = 'output window, operand 0, single buffered']
    #allocation3 [shape = 's32[1]{0}', space=sflag, size = 0x4, scoped, tag = 'scoped memory for patch_embedding.1']
    %8 = vsyncpa [#allocation3], 0
    // Predicated region
    $region2: #{patch_embedding.1} parent=1 // pred_check
      _
    $region3: #{patch_embedding.1} parent=1 // pred_check_branch
      %10 = sbr.rel (0) target = $region5
    $region4: #{patch_embedding.1} parent=1 // pred_region
      _
    $region5: #{patch_embedding.1} parent=1 // pred_fallthru
      _
    // Predicated region
    $region6: #{patch_embedding.1} parent=1 // pred_check
      _
    $region7: #{patch_embedding.1} parent=1 // pred_check_branch
      %12 = sbr.rel (0) target = $region9
    $region8: #{patch_embedding.1} parent=1 // pred_region
      _
    $region9: #{patch_embedding.1} parent=1 // pred_fallthru
      _
    // Predicated region
    $region10: #{patch_embedding.1} parent=1 // pred_check
      _
    $region11: #{patch_embedding.1} parent=1 // pred_check_branch
      %14 = sbr.rel (0) target = $region13
    $region12: #{patch_embedding.1} parent=1 // pred_region
      _
    $region13: #{patch_embedding.1} parent=1 // pred_fallthru
      _
    %v16 = vld [vmem:[%s1] sm:$0xf]
    %v17 = vld [vmem:[%s1 + $0x4] sm:$0xf]
    %v18 = vld [vmem:[%s1 + $0x8] sm:$0xf]
    %v19 = vld [vmem:[%s1 + $0xc] sm:$0xf]
    %v20 = vld [vmem:[%s1 + $0x10] sm:$0xf]
    %v21 = vld [vmem:[%s1 + $0x14] sm:$0xf]
    %v22 = vld [vmem:[%s1 + $0x18] sm:$0xf]
    %v23 = vld [vmem:[%s1 + $0x1c] sm:$0xf]
    %v24 = vld [vmem:[%s2] sm:$0xff]
    %v25 = vld [vmem:[%s2 + $0x8] sm:$0xff]
    %v26 = vld [vmem:[%s2 + $0x10] sm:$0xff]
    %v27 = vld [vmem:[%s2 + $0x18] sm:$0xff]
    %v28 = vld [vmem:[%s0] sm:$0xf]
    %v29 = vld [vmem:[%s0 + $0x4] sm:$0xf]
    %v30 = vld [vmem:[%s0 + $0x8] sm:$0xf]
    %v31 = vld [vmem:[%s0 + $0xc] sm:$0xf]
    %v32 = vld [vmem:[%s0 + $0x10] sm:$0xf]
    %v33 = vld [vmem:[%s0 + $0x14] sm:$0xf]
    %v34 = vld [vmem:[%s0 + $0x18] sm:$0xf]
    %v35 = vld [vmem:[%s0 + $0x1c] sm:$0xf]
    %v44 = vunpack.c.l.b16 %v28
    %v45 = vunpack.c.l.b16 %v29
    %v46 = vunpack.c.l.b16 %v30
    %v47 = vunpack.c.l.b16 %v31
    %v48 = vunpack.c.l.b16 %v32
    %v49 = vunpack.c.l.b16 %v33
    %v50 = vunpack.c.l.b16 %v34
    %v51 = vunpack.c.l.b16 %v35
    %v52 = vpack.c.b16 %v45, %v44
    %v53 = vpack.c.b16 %v47, %v46
    %v54 = vpack.c.b16 %v49, %v48
    %v55 = vpack.c.b16 %v51, %v50
    %v64 = vunpack.c.l.b16 %v16
    %v65 = vunpack.c.l.b16 %v17
    %v66 = vunpack.c.l.b16 %v18
    %v67 = vunpack.c.l.b16 %v19
    %v68 = vunpack.c.l.b16 %v20
    %v69 = vunpack.c.l.b16 %v21
    %v70 = vunpack.c.l.b16 %v22
    %v71 = vunpack.c.l.b16 %v23
    %v72 = vpack.c.b16 %v65, %v64
    %v73 = vpack.c.b16 %v67, %v66
    %v74 = vpack.c.b16 %v69, %v68
    %v75 = vpack.c.b16 %v71, %v70
    %vm80 = vcmask 523264
    %v82 = vsel %vm80, %v52, 0
    %v85 = vsel %vm80, %v53, 0
    %v88 = vsel %vm80, %v54, 0
    %v91 = vsel %vm80, %v55, 0
    %93 = vmatprep.subr.bf16.mxu0 0
    %94 = vmatpush1.bf16.msra.mxu0 %v72
    %95 = vmatprep.subr.bf16.mxu0 0
    %96 = vmatpush1.bf16.msra.mxu0 %v73
    %97 = vmatprep.subr.bf16.mxu0 0
    %98 = vmatpush1.bf16.msra.mxu0 %v74
    %99 = vmatprep.subr.bf16.mxu0 0
    %100 = vmatpush1.bf16.msra.mxu0 %v75
    %101 = vmatprep.subr.bf16.mxu0 0
    %102 = vmatpush1.bf16.msra.mxu0 0
    %103 = vmatprep.subr.bf16.mxu0 0
    %104 = vmatpush1.bf16.msra.mxu0 0
    %105 = vmatprep.subr.bf16.mxu0 0
    %106 = vmatpush1.bf16.msra.mxu0 0
    %107 = vmatprep.subr.bf16.mxu0 0
    %108 = vmatpush1.bf16.msra.mxu0 0
    %109 = vmatprep.subr.bf16.mxu0 0
    %110 = vmatpush1.bf16.msra.mxu0 0
    %111 = vmatprep.subr.bf16.mxu0 0
    %112 = vmatpush1.bf16.msra.mxu0 0
    %113 = vmatprep.subr.bf16.mxu0 0
    %114 = vmatpush1.bf16.msra.mxu0 0
    %115 = vmatprep.subr.bf16.mxu0 0
    %116 = vmatpush1.bf16.msra.mxu0 0
    %117 = vmatprep.subr.bf16.mxu0 0
    %118 = vmatpush1.bf16.msra.mxu0 0
    %119 = vmatprep.subr.bf16.mxu0 0
    %120 = vmatpush1.bf16.msra.mxu0 0
    %121 = vmatprep.subr.bf16.mxu0 0
    %122 = vmatpush1.bf16.msra.mxu0 0
    %123 = vmatprep.subr.bf16.mxu0 0
    %124 = vmatpush1.bf16.msra.mxu0 0
    %125 = vmatprep.mubr.bf16.mxu0 0
    %126 = vmatmul.mubr.bf16.gmra.mrb[0].mxu0 %v82
    %v127 = vpop.f32.mrb[0].mxu0
    %v128 = vadd.f32 0.0, %v127
    %v129 = vpop.f32.mrb[0].mxu0
    %v130 = vpop.f32.mrb[0].mxu0
    %v131 = vadd.f32 0.0, %v130
    %v132 = vpop.f32.mrb[0].mxu0
    %133 = vmatprep.mubr.bf16.mxu0 0
    %134 = vmatmul.mubr.bf16.gmra.mrb[0].mxu0 %v85
    %v135 = vpop.f32.mrb[0].mxu0
    %v136 = vadd.f32 0.0, %v135
    %v137 = vpop.f32.mrb[0].mxu0
    %v138 = vpop.f32.mrb[0].mxu0
    %v139 = vadd.f32 0.0, %v138
    %v140 = vpop.f32.mrb[0].mxu0
    %141 = vmatprep.mubr.bf16.mxu0 0
    %142 = vmatmul.mubr.bf16.gmra.mrb[0].mxu0 %v88
    %v143 = vpop.f32.mrb[0].mxu0
    %v144 = vadd.f32 0.0, %v143
    %v145 = vpop.f32.mrb[0].mxu0
    %v146 = vpop.f32.mrb[0].mxu0
    %v147 = vadd.f32 0.0, %v146
    %v148 = vpop.f32.mrb[0].mxu0
    %149 = vmatprep.mubr.bf16.mxu0 0
    %150 = vmatmul.mubr.bf16.gmra.mrb[0].mxu0 %v91
    %v151 = vpop.f32.mrb[0].mxu0
    %v152 = vadd.f32 0.0, %v151
    %v153 = vpop.f32.mrb[0].mxu0
    %v154 = vpop.f32.mrb[0].mxu0
    %v155 = vadd.f32 0.0, %v154
    %v156 = vpop.f32.mrb[0].mxu0
    %157 = vdwg.mxu0
    %v158 = vadd.f32 %v128, %v24
    %v159 = vadd.f32 %v131, %v25
    %v160 = vadd.f32 %v136, %v26
    %v161 = vadd.f32 %v139, %v27
    %v162 = vadd.f32 %v144, %v24
    %v163 = vadd.f32 %v147, %v25
    %v164 = vadd.f32 %v152, %v26
    %v165 = vadd.f32 %v155, %v27
    %166 = vst [vmem:[#allocation2] sm:$0xff] %v158
    %167 = vst [vmem:[#allocation2 + $0x8] sm:$0xff] %v159
    %168 = vst [vmem:[#allocation2 + $0x10] sm:$0xff] %v160
    %169 = vst [vmem:[#allocation2 + $0x18] sm:$0xff] %v161
    %170 = vst [vmem:[#allocation2 + $0x20] sm:$0xff] %v162
    %171 = vst [vmem:[#allocation2 + $0x28] sm:$0xff] %v163
    %172 = vst [vmem:[#allocation2 + $0x30] sm:$0xff] %v164
    %173 = vst [vmem:[#allocation2 + $0x38] sm:$0xff] %v165
    // Predicated region
    $region14: #{patch_embedding.1} parent=1 // pred_check
      _
    $region15: #{patch_embedding.1} parent=1 // pred_check_branch
      %175 = sbr.rel (0) target = $region17
    $region16: #{patch_embedding.1} parent=1 // pred_region
      %s177 = ssub.s32 1024, 1024
      %178 = vsyncadd [#allocation3], %s177
      %s179 = sshll.u32 [#allocation2], 4
      %s180 = int_to_ptr.vmem [resolvable:$true] %s179
      %185 = dma.vmem_to_hbm [thread:$0]  %s180, 1024, %s3, [#allocation3], 128, 128, 8
    $region17: #{patch_embedding.1} parent=1 // pred_fallthru
      _
    // Predicated region
    $region18: #{patch_embedding.1} parent=1 // pred_check
      _
    $region19: #{patch_embedding.1} parent=1 // pred_check_branch
      %187 = sbr.rel (0) target = $region21
    $region20: #{patch_embedding.1} parent=1 // pred_region
      %188 = dma.done [#allocation3], 1024
    $region21: #{patch_embedding.1} parent=1 // pred_fallthru
      _
    %189 = vsyncpa [#allocation3], 1

</llo_original>
